<compile_context>
chip_gen: v7x
topology: tpu7x:2x2x1
jax: 0.10.0
libtpu: 0.0.40
codegen_flags: <defaults>
</compile_context>

<pallas_src>
import functools

import jax
import jax.numpy as jnp
from jax.experimental import pallas as pl
from jax.experimental.pallas import tpu as pltpu


def _rmsnorm_kernel(x_ref, w_ref, o_ref, *, eps):
    # x_ref: (tile_rows, D), w_ref: (1, D), o_ref: (tile_rows, D)
    xf = x_ref[...].astype(jnp.float32)
    # Reduction always in f32 regardless of I/O dtype.
    ms = jnp.mean(xf * xf, axis=-1, keepdims=True)       # (tile_rows, 1) f32
    inv = jax.lax.rsqrt(ms + eps)                         # EUP rsqrt (free slot)
    wf = w_ref[...].astype(jnp.float32)
    # All math in f32; a single cast at the store (bf16 rounds exactly once).
    o_ref[...] = ((xf * inv) * wf).astype(o_ref.dtype)


@functools.lru_cache(maxsize=None)
def _vmem_capacity_bytes():
    """Physical VMEM capacity of the local chip (conservative fallback)."""
    try:
        cap = int(pltpu.get_tpu_info().vmem_capacity_bytes)
        if cap > 0:
            return cap
    except Exception:
        pass
    kind = ""
    try:
        kind = jax.devices()[0].device_kind.lower()
    except Exception:
        pass
    if any(tag in kind for tag in ("v4", "v5", "v6")):
        return 128 * 1024 * 1024
    return 64 * 1024 * 1024  # v7x-safe default when undetectable


@functools.lru_cache(maxsize=None)
def _num_tensorcores():
    """TensorCores per chip visible to this kernel (2 on v7x, else 1)."""
    try:
        kind = jax.devices()[0].device_kind.lower()
    except Exception:
        return 1
    return 2 if ("v7" in kind or "7x" in kind) else 1


def _choose_tile_rows(rows, d, itemsize, vmem_budget, num_cores):
    """Largest row tile that fits the VMEM pipeline budget.

    Single-TC chips: biggest tile, no artificial step-count preference (extra
    grid steps only add ~0.35 us/step overhead).  Multi-TC chips: additionally
    cap the tile so every TensorCore gets at least one block.  Prefers a tile
    that divides `rows` exactly; otherwise the ragged tail block is handled by
    Pallas' automatic edge masking via the cdiv grid (never padded in HBM).
    """
    # dtype-aware sublane-packing floor.
    if itemsize >= 4:
        min_rows = 8
    elif itemsize == 2:
        min_rows = 16
    else:
        min_rows = 32

    # VMEM-resident bytes per block-row: double-buffered input + output blocks
    # (I/O dtype) + ~2 full f32 copies of the block for Mosaic-materialized
    # elementwise temporaries (x_f32 / squares / scaled product) + stats.
    per_row = d * (4 * itemsize + 2 * 4) + 16
    max_rows = max(min_rows, vmem_budget // per_row)

    cap = max_rows
    if num_cores > 1 and rows >= num_cores * min_rows:
        cap = min(cap, rows // num_cores)  # let every TensorCore stream

    if rows <= cap:
        return rows  # one block covering the full row extent (always legal)

    cap = max(min_rows, (cap // min_rows) * min_rows)
    # Prefer an exactly-dividing tile near the cap; don't shrink below half the
    # cap just to get exact division (tail masking beats tiny tiles).
    t = cap
    floor = max(min_rows, cap // 2)
    while t >= floor:
        if rows % t == 0:
            return t
        t -= min_rows
    return cap  # ragged tail block auto-masked by Pallas


def rmsnorm(x, weight, eps=1e-5):
    """RMSNorm over the last axis of x, scaled by `weight` (shape (D,)).

    Matches: x * rsqrt(mean(x**2, -1, keepdim=True) + eps) * weight
    """
    orig_shape = x.shape
    d = orig_shape[-1]
    rows = 1
    for s in orig_shape[:-1]:
        rows *= s
    x2 = x.reshape(rows, d)
    w2 = weight.reshape(1, d)  # keep parameter dtype; cast to f32 in-kernel

    vmem_cap = _vmem_capacity_bytes()
    vmem_budget = (vmem_cap * 5) // 8   # pipeline blocks + in-kernel f32 temps
    vmem_limit = (vmem_cap * 3) // 4    # scoped-VMEM limit handed to Mosaic
    num_cores = _num_tensorcores()

    itemsize = jnp.dtype(x.dtype).itemsize
    tile_rows = _choose_tile_rows(rows, d, itemsize, vmem_budget, num_cores)
    grid_steps = pl.cdiv(rows, tile_rows)

    # Explicit megacore split on multi-TC chips (v7x): CORE_PARALLEL actually
    # shards the row axis across TensorCores; the "parallel" string does not.
    if num_cores > 1 and grid_steps >= num_cores:
        dim_sem = (pltpu.CORE_PARALLEL,)
    else:
        dim_sem = ("parallel",)

    out = pl.pallas_call(
        functools.partial(_rmsnorm_kernel, eps=eps),
        out_shape=jax.ShapeDtypeStruct((rows, d), x.dtype),
        grid_spec=pltpu.PrefetchScalarGridSpec(
            num_scalar_prefetch=0,
            grid=(grid_steps,),
            in_specs=[
                pl.BlockSpec((tile_rows, d), lambda i: (i, 0)),
                pl.BlockSpec((1, d), lambda i: (0, 0)),  # weight stays resident
            ],
            out_specs=pl.BlockSpec((tile_rows, d), lambda i: (i, 0)),
        ),
        compiler_params=pltpu.CompilerParams(
            dimension_semantics=dim_sem,
            vmem_limit_bytes=vmem_limit,
        ),
    )(x2, w2)

    return out.reshape(orig_shape)


if __name__ == "__main__":
    key = jax.random.PRNGKey(0)
    B, S, D = 2, 8, 32
    eps = 1e-5  # matches the PyTorch module's default

    x = jax.random.normal(key, (B, S, D), dtype=jnp.float32)
    # Deterministic parameter init: RMSNorm weight initialized to ones
    # (matching nn.Parameter(torch.ones(d_model))).
    weight = jnp.ones((D,), dtype=jnp.float32)

    # f32 path
    out = jax.block_until_ready(rmsnorm(x, weight, eps=eps))
    ref = x * jax.lax.rsqrt(jnp.mean(x * x, axis=-1, keepdims=True) + eps) * weight
    assert out.shape == x.shape
    assert jnp.allclose(out, ref, atol=1e-5, rtol=1e-5), "f32 mismatch vs reference"

    # bf16 path (exercises the single-cast narrow-dtype store); loose tolerance
    # only because the *input* is bf16-quantized — the math itself is f32.
    x_bf16 = x.astype(jnp.bfloat16)
    out_bf16 = jax.block_until_ready(rmsnorm(x_bf16, weight, eps=eps))
    xf = x_bf16.astype(jnp.float32)
    ref_bf16 = (
        xf * jax.lax.rsqrt(jnp.mean(xf * xf, axis=-1, keepdims=True) + eps) * weight
    )
    assert out_bf16.shape == x_bf16.shape
    assert jnp.allclose(
        out_bf16.astype(jnp.float32), ref_bf16, atol=5e-2, rtol=5e-2
    ), "bf16 mismatch vs reference"

    print("KERNEL_OK")
</pallas_src>

<mosaic_0001>
module attributes {stable_mosaic.version = 11 : i64} {
  func.func @_rmsnorm_kernel(%arg0: i32, %arg1: memref<16x32xf32, #tpu.memory_space<vmem>>, %arg2: memref<1x32xf32, #tpu.memory_space<vmem>>, %arg3: memref<16x32xf32, #tpu.memory_space<vmem>>) attributes {dimension_semantics = [#tpu.dimension_semantics<parallel>], iteration_bounds = array<i64: 1>, scalar_prefetch = 0 : i64, scratch_operands = 0 : i64, tpu.core_type = #tpu.core_type<tc>, window_params = [{transform_indices = @transform_0, window_bounds = array<i64: 16, 32>}, {pipeline_mode = #tpu.pipeline_mode<synchronous>, transform_indices = @transform_1, window_bounds = array<i64: 1, 32>}, {transform_indices = @transform_2, window_bounds = array<i64: 16, 32>}]} {
    %c0 = arith.constant 0 : index
    %c0_0 = arith.constant 0 : index
    %0 = vector.load %arg1[%c0, %c0_0] : memref<16x32xf32, #tpu.memory_space<vmem>>, vector<16x32xf32>
    %1 = arith.mulf %0, %0 : vector<16x32xf32>
    %cst = arith.constant dense<0.000000e+00> : vector<16xf32>
    %2 = vector.multi_reduction <add>, %1, %cst [1] : vector<16x32xf32> to vector<16xf32>
    %3 = vector.shape_cast %2 : vector<16xf32> to vector<16x1xf32>
    %cst_1 = arith.constant 3.200000e+01 : f32
    %4 = vector.broadcast %cst_1 : f32 to vector<16x1xf32>
    %5 = arith.divf %3, %4 : vector<16x1xf32>
    %cst_2 = arith.constant 9.99999974E-6 : f32
    %6 = vector.broadcast %cst_2 : f32 to vector<16x1xf32>
    %7 = arith.addf %5, %6 : vector<16x1xf32>
    %8 = math.rsqrt %7 : vector<16x1xf32>
    %c0_3 = arith.constant 0 : index
    %c0_4 = arith.constant 0 : index
    %9 = vector.load %arg2[%c0_3, %c0_4] : memref<1x32xf32, #tpu.memory_space<vmem>>, vector<1x32xf32>
    %10 = vector.broadcast %8 : vector<16x1xf32> to vector<16x32xf32>
    %11 = arith.mulf %0, %10 : vector<16x32xf32>
    %12 = vector.broadcast %9 : vector<1x32xf32> to vector<16x32xf32>
    %13 = arith.mulf %11, %12 : vector<16x32xf32>
    %c0_5 = arith.constant 0 : index
    %c0_6 = arith.constant 0 : index
    %14 = vector.load %arg3[%c0_5, %c0_6] : memref<16x32xf32, #tpu.memory_space<vmem>>, vector<16x32xf32>
    tpu.vector_store %arg3[%c0_5, %c0_6], %13 {strides = array<i32>} : memref<16x32xf32, #tpu.memory_space<vmem>>, vector<16x32xf32>,
    return
  }
  func.func @transform_0(%arg0: i32) -> (i32, i32) {
    %c0_i32 = arith.constant 0 : i32
    %c0_i32_0 = arith.constant 0 : i32
    return %arg0, %c0_i32 : i32, i32
  }
  func.func @transform_1(%arg0: i32) -> (i32, i32) {
    %c0_i32 = arith.constant 0 : i32
    %c0_i32_0 = arith.constant 0 : i32
    %c0_i32_1 = arith.constant 0 : i32
    return %c0_i32, %c0_i32_0 : i32, i32
  }
  func.func @transform_2(%arg0: i32) -> (i32, i32) {
    %c0_i32 = arith.constant 0 : i32
    %c0_i32_0 = arith.constant 0 : i32
    return %arg0, %c0_i32 : i32, i32
  }
}

</mosaic_0001>

<llo_original>
// kernel: tpu_custom_call.1
$region0: #{tpu_custom_call.1}
  #allocation0 [shape = 'u32[]', space=smem, size = 0x4, offset = 0x4, fixed_abs, tag = 'smem constant byte address 0x4 - core index']
  #allocation1 [shape = 'u32[144,128]{1,0:T(1,128)}', space=vmem, size = 0x12000, scoped, tag = 'internal scratch']
  %s0 = inlined_call_operand.hbm [shape: f32[16,32], index: 0, kind: input, shape index: {}]
  %s1 = inlined_call_operand.vmem [shape: f32[1,32], index: 1, kind: input, shape index: {}]
  %s2 = inlined_call_operand.hbm [shape: f32[16,32], index: 2, kind: output, shape index: {}]
  %s3 = sld [smem:[#allocation0]]
  $region22: #{tpu_custom_call.1} parent=0
    _
  %s5 = ssub.s32 1, %s3
  %s6 = scalar_select 0, %s5, %s3
  $region1: #{tpu_custom_call.1} parent=0
    #allocation2 [shape = 'u8[8192]{0}', space=vmem, size = 0x2000, scoped, tag = 'input window, operand 0, single buffered']
    #allocation3 [shape = 's32[1]{0}', space=sflag, size = 0x4, scoped, tag = 'scoped memory for tpu_custom_call.1']
    #allocation4 [shape = 's32[1]{0}', space=sflag, size = 0x4, scoped, tag = 'scoped memory for tpu_custom_call.1']
    #allocation5 [shape = 'u8[8192]{0}', space=vmem, size = 0x2000, scoped, tag = 'output window, operand 0, single buffered']
    %7 = vsyncpa [#allocation3], 0
    %8 = vsyncpa [#allocation4], 0
    // Predicated region
    $region2: #{tpu_custom_call.1} parent=1 // pred_check
      _
    $region3: #{tpu_custom_call.1} parent=1 // pred_check_branch
      %10 = sbr.rel (0) target = $region5
    $region4: #{tpu_custom_call.1} parent=1 // pred_region
      %s12 = ssub.s32 256, 256
      %13 = vsyncadd [#allocation3], %s12
      %s14 = sshll.u32 [#allocation2], 4
      %s15 = int_to_ptr.vmem [resolvable:$true] %s14
      %20 = dma.hbm_to_vmem [thread:$0]  %s0, 256, %s15, [#allocation3], 128, 128, 8
    $region5: #{tpu_custom_call.1} parent=1 // pred_fallthru
      _
    // Predicated region
    $region6: #{tpu_custom_call.1} parent=1 // pred_check
      _
    $region7: #{tpu_custom_call.1} parent=1 // pred_check_branch
      %22 = sbr.rel (0) target = $region9
    $region8: #{tpu_custom_call.1} parent=1 // pred_region
      _
    $region9: #{tpu_custom_call.1} parent=1 // pred_fallthru
      _
    // Predicated region
    $region10: #{tpu_custom_call.1} parent=1 // pred_check
      _
    $region11: #{tpu_custom_call.1} parent=1 // pred_check_branch
      %24 = sbr.rel (0) target = $region13
    $region12: #{tpu_custom_call.1} parent=1 // pred_region
      %25 = dma.done [#allocation3], 256
    $region13: #{tpu_custom_call.1} parent=1 // pred_fallthru
      _
    %v26 = vld [vmem:[#allocation2] sm:$0xff]
    %v27 = vld [vmem:[#allocation2 + $0x8] sm:$0xff]
    %v28 = vmul.f32 %v26, %v26
    %v29 = vmul.f32 %v27, %v27
    %vm30 = vcmask 261120
    %v31 = vsel %vm30, %v28, 0.0
    %32 = vadd.xlane.f32.xlu0 %v31
    %v33 = vpop.xlane.xlu0 %32
    %v34 = vsel %vm30, %v29, 0.0
    %35 = vadd.xlane.f32.xlu0 %v34
    %v36 = vpop.xlane.xlu0 %35
    %v37 = vrcp.pop 32.0
    %v38 = vmul.f32 %v33, %v37
    %v39 = vmul.f32 %v36, %v37
    %v40 = vadd.f32 %v38, 1e-05
    %v41 = vadd.f32 %v39, 1e-05
    %v42 = vrsqrt.pop %v40
    %v43 = vrsqrt.pop %v41
    %v44 = vld [vmem:[%s1] sm:$0x1]
    %v45 = vmul.f32 %v26, %v42
    %v46 = vmul.f32 %v27, %v43
    %v48 = vlaneseq
    %v49 = vshrl.u32 %v48, 7
    %v50 = vsub.s32 0, %v49
    %v51 = vrot.slane %v44, %v50
    %v53 = vmul.f32 %v45, %v51
    %v54 = vmul.f32 %v46, %v51
    %55 = vst.msk [vmem:[#allocation5] sm:$0xff] %vm30, %v53
    %56 = vst.msk [vmem:[#allocation5 + $0x8] sm:$0xff] %vm30, %v54
    // Predicated region
    $region14: #{tpu_custom_call.1} parent=1 // pred_check
      _
    $region15: #{tpu_custom_call.1} parent=1 // pred_check_branch
      %58 = sbr.rel (0) target = $region17
    $region16: #{tpu_custom_call.1} parent=1 // pred_region
      %s60 = ssub.s32 256, 256
      %61 = vsyncadd [#allocation4], %s60
      %s62 = sshll.u32 [#allocation5], 4
      %s63 = int_to_ptr.vmem [resolvable:$true] %s62
      %68 = dma.vmem_to_hbm [thread:$0]  %s63, 256, %s2, [#allocation4], 128, 128, 8
    $region17: #{tpu_custom_call.1} parent=1 // pred_fallthru
      _
    // Predicated region
    $region18: #{tpu_custom_call.1} parent=1 // pred_check
      _
    $region19: #{tpu_custom_call.1} parent=1 // pred_check_branch
      %70 = sbr.rel (0) target = $region21
    $region20: #{tpu_custom_call.1} parent=1 // pred_region
      %71 = dma.done [#allocation4], 256
    $region21: #{tpu_custom_call.1} parent=1 // pred_fallthru
      _
    %72 = vsyncpa [#allocation3], 1
    %73 = vsyncpa [#allocation4], 1

</llo_original>
